<compile_context>
chip_gen: v5e
topology: v5e:2x2
jax: 0.10.0
libtpu: 0.0.40
codegen_flags: <defaults>
</compile_context>

<pallas_src>
import jax
import jax.numpy as jnp
from jax.experimental import pallas as pl
from jax.experimental.pallas import tpu as pltpu

IN_DIM = 344
H1, H2, H3, OUT = 200, 100, 10, 2


def _round_up(v, m):
    return ((v + m - 1) // m) * m


def _mlp_kernel(x_ref, w1_ref, w2_ref, w3_ref, w4_ref,
                b1_ref, b2_ref, b3_ref, b4_ref, o_ref):
    """x_ref: (TILE_B, IN_DIM); w*: bf16 (in,out); b*: f32 (1,out)."""
    # Cast to bf16 in-kernel (hidden under MXU work) — no wrapper-side HBM pass.
    x = x_ref[...].astype(jnp.bfloat16)

    # Layer 1: Linear(344, 200) + Dropout(eval: identity) + ReLU
    h = jnp.dot(x, w1_ref[...], preferred_element_type=jnp.float32) + b1_ref[...]
    h = jnp.maximum(h, 0.0)

    # Layer 2: Linear(200, 100) + Dropout(eval: identity) + ReLU
    h = jnp.dot(h.astype(jnp.bfloat16), w2_ref[...],
                preferred_element_type=jnp.float32) + b2_ref[...]
    h = jnp.maximum(h, 0.0)

    # Layer 3: Linear(100, 10) + ReLU
    h = jnp.dot(h.astype(jnp.bfloat16), w3_ref[...],
                preferred_element_type=jnp.float32) + b3_ref[...]
    h = jnp.maximum(h, 0.0)

    # Layer 4: Linear(10, 2) — no activation
    o_ref[...] = (jnp.dot(h.astype(jnp.bfloat16), w4_ref[...],
                          preferred_element_type=jnp.float32) + b4_ref[...]
                  ).astype(o_ref.dtype)


def prepare_params(params):
    """Cast weights to bf16 (MXU-native) and shape biases as (1, out) f32."""
    ws = tuple(params[f"w{i}"].astype(jnp.bfloat16) for i in range(1, 5))
    bs = tuple(params[f"b{i}"].astype(jnp.float32).reshape(1, -1) for i in range(1, 5))
    return ws + bs


def ft_mort_forward(x, prepared, *, tile_b=2048):
    """x: (B, IN_DIM) f32 or bf16 (no wrapper cast).  prepared: (w1..w4, b1..b4)."""
    w1, w2, w3, w4, b1, b2, b3, b4 = prepared
    B = x.shape[0]

    if B <= 256:
        # Latency path: one full-batch block, single grid step.
        tb = B
    else:
        # Throughput path: >= 2 grid steps so v7x's two TCs both get work
        # (dimension_semantics="parallel" shards the grid); tile is a
        # multiple of 16 and capped at tile_b.
        tb = min(tile_b, _round_up(pl.cdiv(B, 2), 16))
    grid = (pl.cdiv(B, tb),)

    flops = 2 * B * (IN_DIM * H1 + H1 * H2 + H2 * H3 + H3 * OUT)
    param_bytes = ((IN_DIM * H1 + H1 * H2 + H2 * H3 + H3 * OUT) * 2
                   + (H1 + H2 + H3 + OUT) * 4)
    bytes_accessed = int(B * IN_DIM * x.dtype.itemsize + B * OUT * 4 + param_bytes)
    cost = pl.CostEstimate(flops=flops, transcendentals=0,
                           bytes_accessed=bytes_accessed)

    const = lambda i: (0, 0)   # resident params: DMA'd once, reused every step

    # NOTE: the last batch tile may be ragged; Pallas pads it.  This is safe
    # only because rows are fully independent and out-of-range output rows are
    # dropped — do not add batch-wise reductions inside the kernel.
    return pl.pallas_call(
        _mlp_kernel,
        out_shape=jax.ShapeDtypeStruct((B, OUT), jnp.float32),
        grid=grid,
        in_specs=[
            pl.BlockSpec((tb, IN_DIM), lambda i: (i, 0)),   # x tile (pipelined)
            pl.BlockSpec((IN_DIM, H1), const),              # w1 (resident)
            pl.BlockSpec((H1, H2), const),                  # w2
            pl.BlockSpec((H2, H3), const),                  # w3
            pl.BlockSpec((H3, OUT), const),                 # w4
            pl.BlockSpec((1, H1), const),                   # b1
            pl.BlockSpec((1, H2), const),                   # b2
            pl.BlockSpec((1, H3), const),                   # b3
            pl.BlockSpec((1, OUT), const),                  # b4
        ],
        out_specs=pl.BlockSpec((tb, OUT), lambda i: (i, 0)),
        compiler_params=pltpu.CompilerParams(
            dimension_semantics=("parallel",),              # shards grid across TCs on v7x
            vmem_limit_bytes=32 * 1024 * 1024),             # headroom over v5e's 16 MiB default
        cost_estimate=cost,
    )(x, w1, w2, w3, w4, b1, b2, b3, b4)


def init_params(key):
    """Deterministic init mirroring PyTorch Linear default (uniform +-1/sqrt(fan_in)).
    Weights stored as (in_features, out_features); biases as (1, out_features)."""
    dims = [(IN_DIM, H1), (H1, H2), (H2, H3), (H3, OUT)]
    params = {}
    keys = jax.random.split(key, 2 * len(dims))
    for i, (fan_in, fan_out) in enumerate(dims):
        bound = 1.0 / (fan_in ** 0.5)
        params[f"w{i + 1}"] = jax.random.uniform(
            keys[2 * i], (fan_in, fan_out), minval=-bound, maxval=bound,
            dtype=jnp.float32)
        params[f"b{i + 1}"] = jax.random.uniform(
            keys[2 * i + 1], (1, fan_out), minval=-bound, maxval=bound,
            dtype=jnp.float32)
    return params


def _reference_forward(x, p):
    """Pure-JAX reference emulating the kernel numerics (bf16 matmul, f32 accumulate)."""
    def mm(a, w):
        return jnp.dot(a.astype(jnp.bfloat16), w.astype(jnp.bfloat16),
                       preferred_element_type=jnp.float32)
    h = jnp.maximum(mm(x, p["w1"]) + p["b1"], 0.0)
    h = jnp.maximum(mm(h, p["w2"]) + p["b2"], 0.0)
    h = jnp.maximum(mm(h, p["w3"]) + p["b3"], 0.0)
    return mm(h, p["w4"]) + p["b4"]


if __name__ == "__main__":
    key = jax.random.PRNGKey(0)
    k_param, k_x = jax.random.split(key)

    params = init_params(k_param)
    prepared = prepare_params(params)

    # Small-batch (latency) path: single block, one grid step.
    B = 8
    x = jax.random.normal(k_x, (B, IN_DIM), dtype=jnp.float32)
    out = jax.block_until_ready(ft_mort_forward(x, prepared))
    ref = _reference_forward(x, params)
    assert out.shape == (B, OUT)
    assert jnp.allclose(out, ref, atol=2e-3, rtol=2e-3), "small-batch mismatch vs reference"

    # Throughput path: >= 2 grid steps (tb = 512 here) with a ragged last tile.
    B2 = 1000
    x2 = jax.random.normal(k_x, (B2, IN_DIM), dtype=jnp.float32)
    out2 = jax.block_until_ready(ft_mort_forward(x2, prepared))
    ref2 = _reference_forward(x2, params)
    assert out2.shape == (B2, OUT)
    assert jnp.allclose(out2, ref2, atol=2e-3, rtol=2e-3), "tiled-batch mismatch vs reference"

    # TODO(synk): training-mode Dropout (p=0.2 / p=0.1 with 1/(1-p) scaling) is not
    # implemented; forward matches model.eval() semantics.
    print("KERNEL_OK")
</pallas_src>

<mosaic_0001>
module attributes {stable_mosaic.version = 11 : i64} {
  func.func @_mlp_kernel(%arg0: i32, %arg1: memref<8x344xf32, #tpu.memory_space<vmem>>, %arg2: memref<344x200xbf16, #tpu.memory_space<vmem>>, %arg3: memref<200x100xbf16, #tpu.memory_space<vmem>>, %arg4: memref<100x10xbf16, #tpu.memory_space<vmem>>, %arg5: memref<10x2xbf16, #tpu.memory_space<vmem>>, %arg6: memref<1x200xf32, #tpu.memory_space<vmem>>, %arg7: memref<1x100xf32, #tpu.memory_space<vmem>>, %arg8: memref<1x10xf32, #tpu.memory_space<vmem>>, %arg9: memref<1x2xf32, #tpu.memory_space<vmem>>, %arg10: memref<8x2xf32, #tpu.memory_space<vmem>>) attributes {dimension_semantics = [#tpu.dimension_semantics<parallel>], iteration_bounds = array<i64: 1>, scalar_prefetch = 0 : i64, scratch_operands = 0 : i64, tpu.core_type = #tpu.core_type<tc>, window_params = [{transform_indices = @transform_0, window_bounds = array<i64: 8, 344>}, {pipeline_mode = #tpu.pipeline_mode<synchronous>, transform_indices = @transform_1, window_bounds = array<i64: 344, 200>}, {pipeline_mode = #tpu.pipeline_mode<synchronous>, transform_indices = @transform_2, window_bounds = array<i64: 200, 100>}, {pipeline_mode = #tpu.pipeline_mode<synchronous>, transform_indices = @transform_3, window_bounds = array<i64: 100, 10>}, {pipeline_mode = #tpu.pipeline_mode<synchronous>, transform_indices = @transform_4, window_bounds = array<i64: 10, 2>}, {pipeline_mode = #tpu.pipeline_mode<synchronous>, transform_indices = @transform_5, window_bounds = array<i64: 1, 200>}, {pipeline_mode = #tpu.pipeline_mode<synchronous>, transform_indices = @transform_6, window_bounds = array<i64: 1, 100>}, {pipeline_mode = #tpu.pipeline_mode<synchronous>, transform_indices = @transform_7, window_bounds = array<i64: 1, 10>}, {pipeline_mode = #tpu.pipeline_mode<synchronous>, transform_indices = @transform_8, window_bounds = array<i64: 1, 2>}, {transform_indices = @transform_9, window_bounds = array<i64: 8, 2>}]} {
    %c0 = arith.constant 0 : index
    %c0_0 = arith.constant 0 : index
    %0 = vector.load %arg1[%c0, %c0_0] : memref<8x344xf32, #tpu.memory_space<vmem>>, vector<8x344xf32>
    %1 = arith.truncf %0 : vector<8x344xf32> to vector<8x344xbf16>
    %c0_1 = arith.constant 0 : index
    %c0_2 = arith.constant 0 : index
    %2 = vector.load %arg2[%c0_1, %c0_2] : memref<344x200xbf16, #tpu.memory_space<vmem>>, vector<344x200xbf16>
    %cst = arith.constant dense<0.000000e+00> : vector<8x200xf32>
    %3 = tpu.matmul %1, %2, %cst {dimension_numbers = #tpu.dot_dimension_numbers<[1], [0], [0], [1], [0, 0, 1, 1], [], []>} : vector<8x344xbf16>, vector<344x200xbf16>, vector<8x200xf32> -> vector<8x200xf32>
    %c0_3 = arith.constant 0 : index
    %c0_4 = arith.constant 0 : index
    %4 = vector.load %arg6[%c0_3, %c0_4] : memref<1x200xf32, #tpu.memory_space<vmem>>, vector<1x200xf32>
    %5 = vector.broadcast %4 : vector<1x200xf32> to vector<8x200xf32>
    %6 = arith.addf %3, %5 : vector<8x200xf32>
    %cst_5 = arith.constant 0.000000e+00 : f32
    %7 = vector.broadcast %cst_5 : f32 to vector<8x200xf32>
    %8 = arith.maximumf %6, %7 : vector<8x200xf32>
    %9 = arith.truncf %8 : vector<8x200xf32> to vector<8x200xbf16>
    %c0_6 = arith.constant 0 : index
    %c0_7 = arith.constant 0 : index
    %10 = vector.load %arg3[%c0_6, %c0_7] : memref<200x100xbf16, #tpu.memory_space<vmem>>, vector<200x100xbf16>
    %cst_8 = arith.constant dense<0.000000e+00> : vector<8x100xf32>
    %11 = tpu.matmul %9, %10, %cst_8 {dimension_numbers = #tpu.dot_dimension_numbers<[1], [0], [0], [1], [0, 0, 1, 1], [], []>} : vector<8x200xbf16>, vector<200x100xbf16>, vector<8x100xf32> -> vector<8x100xf32>
    %c0_9 = arith.constant 0 : index
    %c0_10 = arith.constant 0 : index
    %12 = vector.load %arg7[%c0_9, %c0_10] : memref<1x100xf32, #tpu.memory_space<vmem>>, vector<1x100xf32>
    %13 = vector.broadcast %12 : vector<1x100xf32> to vector<8x100xf32>
    %14 = arith.addf %11, %13 : vector<8x100xf32>
    %cst_11 = arith.constant 0.000000e+00 : f32
    %15 = vector.broadcast %cst_11 : f32 to vector<8x100xf32>
    %16 = arith.maximumf %14, %15 : vector<8x100xf32>
    %17 = arith.truncf %16 : vector<8x100xf32> to vector<8x100xbf16>
    %c0_12 = arith.constant 0 : index
    %c0_13 = arith.constant 0 : index
    %18 = vector.load %arg4[%c0_12, %c0_13] : memref<100x10xbf16, #tpu.memory_space<vmem>>, vector<100x10xbf16>
    %cst_14 = arith.constant dense<0.000000e+00> : vector<8x10xf32>
    %19 = tpu.matmul %17, %18, %cst_14 {dimension_numbers = #tpu.dot_dimension_numbers<[1], [0], [0], [1], [0, 0, 1, 1], [], []>} : vector<8x100xbf16>, vector<100x10xbf16>, vector<8x10xf32> -> vector<8x10xf32>
    %c0_15 = arith.constant 0 : index
    %c0_16 = arith.constant 0 : index
    %20 = vector.load %arg8[%c0_15, %c0_16] : memref<1x10xf32, #tpu.memory_space<vmem>>, vector<1x10xf32>
    %21 = vector.broadcast %20 : vector<1x10xf32> to vector<8x10xf32>
    %22 = arith.addf %19, %21 : vector<8x10xf32>
    %cst_17 = arith.constant 0.000000e+00 : f32
    %23 = vector.broadcast %cst_17 : f32 to vector<8x10xf32>
    %24 = arith.maximumf %22, %23 : vector<8x10xf32>
    %25 = arith.truncf %24 : vector<8x10xf32> to vector<8x10xbf16>
    %c0_18 = arith.constant 0 : index
    %c0_19 = arith.constant 0 : index
    %26 = vector.load %arg5[%c0_18, %c0_19] : memref<10x2xbf16, #tpu.memory_space<vmem>>, vector<10x2xbf16>
    %cst_20 = arith.constant dense<0.000000e+00> : vector<8x2xf32>
    %27 = tpu.matmul %25, %26, %cst_20 {dimension_numbers = #tpu.dot_dimension_numbers<[1], [0], [0], [1], [0, 0, 1, 1], [], []>} : vector<8x10xbf16>, vector<10x2xbf16>, vector<8x2xf32> -> vector<8x2xf32>
    %c0_21 = arith.constant 0 : index
    %c0_22 = arith.constant 0 : index
    %28 = vector.load %arg9[%c0_21, %c0_22] : memref<1x2xf32, #tpu.memory_space<vmem>>, vector<1x2xf32>
    %29 = vector.broadcast %28 : vector<1x2xf32> to vector<8x2xf32>
    %30 = arith.addf %27, %29 : vector<8x2xf32>
    %c0_23 = arith.constant 0 : index
    %c0_24 = arith.constant 0 : index
    %31 = vector.load %arg10[%c0_23, %c0_24] : memref<8x2xf32, #tpu.memory_space<vmem>>, vector<8x2xf32>
    tpu.vector_store %arg10[%c0_23, %c0_24], %30 {strides = array<i32>} : memref<8x2xf32, #tpu.memory_space<vmem>>, vector<8x2xf32>,
    return
  }
  func.func @transform_0(%arg0: i32) -> (i32, i32) {
    %c0_i32 = arith.constant 0 : i32
    %c0_i32_0 = arith.constant 0 : i32
    return %arg0, %c0_i32 : i32, i32
  }
  func.func @transform_1(%arg0: i32) -> (i32, i32) {
    %c0_i32 = arith.constant 0 : i32
    %c0_i32_0 = arith.constant 0 : i32
    %c0_i32_1 = arith.constant 0 : i32
    return %c0_i32, %c0_i32_0 : i32, i32
  }
  func.func @transform_2(%arg0: i32) -> (i32, i32) {
    %c0_i32 = arith.constant 0 : i32
    %c0_i32_0 = arith.constant 0 : i32
    %c0_i32_1 = arith.constant 0 : i32
    return %c0_i32, %c0_i32_0 : i32, i32
  }
  func.func @transform_3(%arg0: i32) -> (i32, i32) {
    %c0_i32 = arith.constant 0 : i32
    %c0_i32_0 = arith.constant 0 : i32
    %c0_i32_1 = arith.constant 0 : i32
    return %c0_i32, %c0_i32_0 : i32, i32
  }
  func.func @transform_4(%arg0: i32) -> (i32, i32) {
    %c0_i32 = arith.constant 0 : i32
    %c0_i32_0 = arith.constant 0 : i32
    %c0_i32_1 = arith.constant 0 : i32
    return %c0_i32, %c0_i32_0 : i32, i32
  }
  func.func @transform_5(%arg0: i32) -> (i32, i32) {
    %c0_i32 = arith.constant 0 : i32
    %c0_i32_0 = arith.constant 0 : i32
    %c0_i32_1 = arith.constant 0 : i32
    return %c0_i32, %c0_i32_0 : i32, i32
  }
  func.func @transform_6(%arg0: i32) -> (i32, i32) {
    %c0_i32 = arith.constant 0 : i32
    %c0_i32_0 = arith.constant 0 : i32
    %c0_i32_1 = arith.constant 0 : i32
    return %c0_i32, %c0_i32_0 : i32, i32
  }
  func.func @transform_7(%arg0: i32) -> (i32, i32) {
    %c0_i32 = arith.constant 0 : i32
    %c0_i32_0 = arith.constant 0 : i32
    %c0_i32_1 = arith.constant 0 : i32
    return %c0_i32, %c0_i32_0 : i32, i32
  }
  func.func @transform_8(%arg0: i32) -> (i32, i32) {
    %c0_i32 = arith.constant 0 : i32
    %c0_i32_0 = arith.constant 0 : i32
    %c0_i32_1 = arith.constant 0 : i32
    return %c0_i32, %c0_i32_0 : i32, i32
  }
  func.func @transform_9(%arg0: i32) -> (i32, i32) {
    %c0_i32 = arith.constant 0 : i32
    %c0_i32_0 = arith.constant 0 : i32
    return %arg0, %c0_i32 : i32, i32
  }
}

</mosaic_0001>

<llo_original>
// kernel: tpu_custom_call.1
$region0: #{tpu_custom_call.1}
  #allocation0 [shape = 'u32[]', space=smem, size = 0x4, offset = 0x4, fixed_abs, tag = 'smem constant byte address 0x4 - core index']
  #allocation1 [shape = 'u32[72,128]{1,0:T(1,128)}', space=vmem, size = 0x9000, scoped, tag = 'internal scratch']
  %s0 = inlined_call_operand.vmem [shape: f32[8,344], index: 0, kind: input, shape index: {}]
  %s1 = inlined_call_operand.vmem [shape: bf16[344,200], index: 1, kind: input, shape index: {}]
  %s2 = inlined_call_operand.vmem [shape: bf16[200,100], index: 2, kind: input, shape index: {}]
  %s3 = inlined_call_operand.vmem [shape: bf16[100,10], index: 3, kind: input, shape index: {}]
  %s4 = inlined_call_operand.vmem [shape: bf16[10,2], index: 4, kind: input, shape index: {}]
  %s5 = inlined_call_operand.vmem [shape: f32[1,200], index: 5, kind: input, shape index: {}]
  %s6 = inlined_call_operand.vmem [shape: f32[1,100], index: 6, kind: input, shape index: {}]
  %s7 = inlined_call_operand.vmem [shape: f32[1,10], index: 7, kind: input, shape index: {}]
  %s8 = inlined_call_operand.vmem [shape: f32[1,2], index: 8, kind: input, shape index: {}]
  %s9 = inlined_call_operand.vmem [shape: f32[8,2], index: 9, kind: output, shape index: {}]
  %s10 = sld [smem:[#allocation0]]
  $region46: #{tpu_custom_call.1} parent=0
    _
  %s12 = ssub.s32 1, %s10
  %s13 = scalar_select 0, %s12, %s10
  // Predicated region
  $region2: #{tpu_custom_call.1} parent=0 // pred_check
    _
  $region3: #{tpu_custom_call.1} parent=0 // pred_check_branch
    %15 = sbr.rel (0) target = $region5
  $region4: #{tpu_custom_call.1} parent=0 // pred_region
    _
  $region5: #{tpu_custom_call.1} parent=0 // pred_fallthru
    _
  // Predicated region
  $region6: #{tpu_custom_call.1} parent=0 // pred_check
    _
  $region7: #{tpu_custom_call.1} parent=0 // pred_check_branch
    %17 = sbr.rel (0) target = $region9
  $region8: #{tpu_custom_call.1} parent=0 // pred_region
    _
  $region9: #{tpu_custom_call.1} parent=0 // pred_fallthru
    _
  // Predicated region
  $region10: #{tpu_custom_call.1} parent=0 // pred_check
    _
  $region11: #{tpu_custom_call.1} parent=0 // pred_check_branch
    %19 = sbr.rel (0) target = $region13
  $region12: #{tpu_custom_call.1} parent=0 // pred_region
    _
  $region13: #{tpu_custom_call.1} parent=0 // pred_fallthru
    _
  // Predicated region
  $region14: #{tpu_custom_call.1} parent=0 // pred_check
    _
  $region15: #{tpu_custom_call.1} parent=0 // pred_check_branch
    %21 = sbr.rel (0) target = $region17
  $region16: #{tpu_custom_call.1} parent=0 // pred_region
    _
  $region17: #{tpu_custom_call.1} parent=0 // pred_fallthru
    _
  // Predicated region
  $region18: #{tpu_custom_call.1} parent=0 // pred_check
    _
  $region19: #{tpu_custom_call.1} parent=0 // pred_check_branch
    %23 = sbr.rel (0) target = $region21
  $region20: #{tpu_custom_call.1} parent=0 // pred_region
    _
  $region21: #{tpu_custom_call.1} parent=0 // pred_fallthru
    _
  // Predicated region
  $region22: #{tpu_custom_call.1} parent=0 // pred_check
    _
  $region23: #{tpu_custom_call.1} parent=0 // pred_check_branch
    %25 = sbr.rel (0) target = $region25
  $region24: #{tpu_custom_call.1} parent=0 // pred_region
    _
  $region25: #{tpu_custom_call.1} parent=0 // pred_fallthru
    _
  // Predicated region
  $region26: #{tpu_custom_call.1} parent=0 // pred_check
    _
  $region27: #{tpu_custom_call.1} parent=0 // pred_check_branch
    %27 = sbr.rel (0) target = $region29
  $region28: #{tpu_custom_call.1} parent=0 // pred_region
    _
  $region29: #{tpu_custom_call.1} parent=0 // pred_fallthru
    _
  // Predicated region
  $region30: #{tpu_custom_call.1} parent=0 // pred_check
    _
  $region31: #{tpu_custom_call.1} parent=0 // pred_check_branch
    %29 = sbr.rel (0) target = $region33
  $region32: #{tpu_custom_call.1} parent=0 // pred_region
    _
  $region33: #{tpu_custom_call.1} parent=0 // pred_fallthru
    _
  // Predicated region
  $region34: #{tpu_custom_call.1} parent=0 // pred_check
    _
  $region35: #{tpu_custom_call.1} parent=0 // pred_check_branch
    %31 = sbr.rel (0) target = $region37
  $region36: #{tpu_custom_call.1} parent=0 // pred_region
    _
  $region37: #{tpu_custom_call.1} parent=0 // pred_fallthru
    _
  %v33 = vld [vmem:[%s0] sm:$0xff]
  %v34 = vld [vmem:[%s0 + $0x8] sm:$0xff]
  %v35 = vld [vmem:[%s0 + $0x10] sm:$0xff]
  %v36 = vpack.c.bf16 %v33, %v33
  %v37 = vpack.c.bf16 %v34, %v34
  %v38 = vpack.c.bf16 %v35, %v35
  %v39 = vld [vmem:[%s1] sm:$0xff]
  %v40 = vld [vmem:[%s1 + $0x8] sm:$0xff]
  %v41 = vld [vmem:[%s1 + $0x10] sm:$0xff]
  %v42 = vld [vmem:[%s1 + $0x18] sm:$0xff]
  %v43 = vld [vmem:[%s1 + $0x20] sm:$0xff]
  %v44 = vld [vmem:[%s1 + $0x28] sm:$0xff]
  %v45 = vld [vmem:[%s1 + $0x30] sm:$0xff]
  %v46 = vld [vmem:[%s1 + $0x38] sm:$0xff]
  %v47 = vld [vmem:[%s1 + $0x40] sm:$0xff]
  %v48 = vld [vmem:[%s1 + $0x48] sm:$0xff]
  %v49 = vld [vmem:[%s1 + $0x50] sm:$0xff]
  %v50 = vld [vmem:[%s1 + $0x58] sm:$0xff]
  %v51 = vld [vmem:[%s1 + $0x60] sm:$0xff]
  %v52 = vld [vmem:[%s1 + $0x68] sm:$0xff]
  %v53 = vld [vmem:[%s1 + $0x70] sm:$0xff]
  %v54 = vld [vmem:[%s1 + $0x78] sm:$0xff]
  %v55 = vld [vmem:[%s1 + $0x80] sm:$0xff]
  %v56 = vld [vmem:[%s1 + $0x88] sm:$0xff]
  %v57 = vld [vmem:[%s1 + $0x90] sm:$0xff]
  %v58 = vld [vmem:[%s1 + $0x98] sm:$0xff]
  %v59 = vld [vmem:[%s1 + $0xa0] sm:$0xff]
  %v60 = vld [vmem:[%s1 + $0xa8] sm:$0xff]
  %v61 = vld [vmem:[%s1 + $0xb0] sm:$0xff]
  %v62 = vld [vmem:[%s1 + $0xb8] sm:$0xff]
  %v63 = vld [vmem:[%s1 + $0xc0] sm:$0xff]
  %v64 = vld [vmem:[%s1 + $0xc8] sm:$0xff]
  %v65 = vld [vmem:[%s1 + $0xd0] sm:$0xff]
  %v66 = vld [vmem:[%s1 + $0xd8] sm:$0xff]
  %v67 = vld [vmem:[%s1 + $0xe0] sm:$0xff]
  %v68 = vld [vmem:[%s1 + $0xe8] sm:$0xff]
  %v69 = vld [vmem:[%s1 + $0xf0] sm:$0xff]
  %v70 = vld [vmem:[%s1 + $0xf8] sm:$0xff]
  %v71 = vld [vmem:[%s1 + $0x100] sm:$0xff]
  %v72 = vld [vmem:[%s1 + $0x108] sm:$0xff]
  %v73 = vld [vmem:[%s1 + $0x110] sm:$0xff]
  %v74 = vld [vmem:[%s1 + $0x118] sm:$0xff]
  %v75 = vld [vmem:[%s1 + $0x120] sm:$0xff]
  %v76 = vld [vmem:[%s1 + $0x128] sm:$0xff]
  %v77 = vld [vmem:[%s1 + $0x130] sm:$0xff]
  %v78 = vld [vmem:[%s1 + $0x138] sm:$0xff]
  %v79 = vld [vmem:[%s1 + $0x140] sm:$0xff]
  %v80 = vld [vmem:[%s1 + $0x148] sm:$0xff]
  %v81 = vld [vmem:[%s1 + $0x150] sm:$0xff]
  %v82 = vld [vmem:[%s5] sm:$0x3]
  %v84 = vperm.slane %v82, 0
  %v85 = vperm.slane %v82, 1
  %v131 = vunpack.c.l.b16 %v39
  %v132 = vunpack.c.h.b16 %v39
  %v133 = vunpack.c.l.b16 %v40
  %v134 = vunpack.c.h.b16 %v40
  %v135 = vunpack.c.l.b16 %v41
  %v136 = vunpack.c.h.b16 %v41
  %v137 = vunpack.c.l.b16 %v42
  %v138 = vunpack.c.h.b16 %v42
  %v139 = vunpack.c.l.b16 %v43
  %v140 = vunpack.c.h.b16 %v43
  %v141 = vunpack.c.l.b16 %v44
  %v142 = vunpack.c.h.b16 %v44
  %v143 = vunpack.c.l.b16 %v45
  %v144 = vunpack.c.h.b16 %v45
  %v145 = vunpack.c.l.b16 %v46
  %v146 = vunpack.c.h.b16 %v46
  %v147 = vunpack.c.l.b16 %v47
  %v148 = vunpack.c.h.b16 %v47
  %v149 = vunpack.c.l.b16 %v48
  %v150 = vunpack.c.h.b16 %v48
  %v151 = vunpack.c.l.b16 %v49
  %v152 = vunpack.c.h.b16 %v49
  %v153 = vunpack.c.l.b16 %v50
  %v154 = vunpack.c.h.b16 %v50
  %v155 = vunpack.c.l.b16 %v51
  %v156 = vunpack.c.h.b16 %v51
  %v157 = vunpack.c.l.b16 %v52
  %v158 = vunpack.c.h.b16 %v52
  %v159 = vunpack.c.l.b16 %v53
  %v160 = vunpack.c.h.b16 %v53
  %v161 = vunpack.c.l.b16 %v54
  %v162 = vunpack.c.h.b16 %v54
  %v163 = vunpack.c.l.b16 %v55
  %v164 = vunpack.c.h.b16 %v55
  %v165 = vunpack.c.l.b16 %v56
  %v166 = vunpack.c.h.b16 %v56
  %v167 = vunpack.c.l.b16 %v57
  %v168 = vunpack.c.h.b16 %v57
  %v169 = vunpack.c.l.b16 %v58
  %v170 = vunpack.c.h.b16 %v58
  %v171 = vunpack.c.l.b16 %v59
  %v172 = vunpack.c.h.b16 %v59
  %v173 = vunpack.c.l.b16 %v60
  %v174 = vunpack.c.h.b16 %v60
  %v175 = vunpack.c.l.b16 %v61
  %v176 = vunpack.c.h.b16 %v61
  %v177 = vunpack.c.l.b16 %v62
  %v178 = vunpack.c.h.b16 %v62
  %v179 = vunpack.c.l.b16 %v63
  %v180 = vunpack.c.h.b16 %v63
  %v181 = vunpack.c.l.b16 %v64
  %v182 = vunpack.c.h.b16 %v64
  %v183 = vunpack.c.l.b16 %v65
  %v184 = vunpack.c.h.b16 %v65
  %v185 = vunpack.c.l.b16 %v66
  %v186 = vunpack.c.h.b16 %v66
  %v187 = vunpack.c.l.b16 %v67
  %v188 = vunpack.c.h.b16 %v67
  %v189 = vunpack.c.l.b16 %v68
  %v190 = vunpack.c.h.b16 %v68
  %v191 = vunpack.c.l.b16 %v69
  %v192 = vunpack.c.h.b16 %v69
  %v193 = vunpack.c.l.b16 %v70
  %v194 = vunpack.c.h.b16 %v70
  %v195 = vunpack.c.l.b16 %v71
  %v196 = vunpack.c.h.b16 %v71
  %v197 = vunpack.c.l.b16 %v72
  %v198 = vunpack.c.h.b16 %v72
  %v199 = vunpack.c.l.b16 %v73
  %v200 = vunpack.c.h.b16 %v73
  %v201 = vunpack.c.l.b16 %v74
  %v202 = vunpack.c.h.b16 %v74
  %v203 = vunpack.c.l.b16 %v75
  %v204 = vunpack.c.h.b16 %v75
  %v205 = vunpack.c.l.b16 %v76
  %v206 = vunpack.c.h.b16 %v76
  %v207 = vunpack.c.l.b16 %v77
  %v208 = vunpack.c.h.b16 %v77
  %v209 = vunpack.c.l.b16 %v78
  %v210 = vunpack.c.h.b16 %v78
  %v211 = vunpack.c.l.b16 %v79
  %v212 = vunpack.c.h.b16 %v79
  %v213 = vunpack.c.l.b16 %v80
  %v214 = vunpack.c.h.b16 %v80
  %v215 = vunpack.c.l.b16 %v81
  %v216 = vunpack.c.h.b16 %v81
  %v217 = vpack.c.b16 %v133, %v131
  %v218 = vpack.c.b16 %v134, %v132
  %v219 = vpack.c.b16 %v137, %v135
  %v220 = vpack.c.b16 %v138, %v136
  %v221 = vpack.c.b16 %v141, %v139
  %v222 = vpack.c.b16 %v142, %v140
  %v223 = vpack.c.b16 %v145, %v143
  %v224 = vpack.c.b16 %v146, %v144
  %v225 = vpack.c.b16 %v149, %v147
  %v226 = vpack.c.b16 %v150, %v148
  %v227 = vpack.c.b16 %v153, %v151
  %v228 = vpack.c.b16 %v154, %v152
  %v229 = vpack.c.b16 %v157, %v155
  %v230 = vpack.c.b16 %v158, %v156
  %v231 = vpack.c.b16 %v161, %v159
  %v232 = vpack.c.b16 %v162, %v160
  %v233 = vpack.c.b16 %v165, %v163
  %v234 = vpack.c.b16 %v166, %v164
  %v235 = vpack.c.b16 %v169, %v167
  %v236 = vpack.c.b16 %v170, %v168
  %v237 = vpack.c.b16 %v173, %v171
  %v238 = vpack.c.b16 %v174, %v172
  %v239 = vpack.c.b16 %v177, %v175
  %v240 = vpack.c.b16 %v178, %v176
  %v241 = vpack.c.b16 %v181, %v179
  %v242 = vpack.c.b16 %v182, %v180
  %v243 = vpack.c.b16 %v185, %v183
  %v244 = vpack.c.b16 %v186, %v184
  %v245 = vpack.c.b16 %v189, %v187
  %v246 = vpack.c.b16 %v190, %v188
  %v247 = vpack.c.b16 %v193, %v191
  %v248 = vpack.c.b16 %v194, %v192
  %v249 = vpack.c.b16 %v197, %v195
  %v250 = vpack.c.b16 %v198, %v196
  %v251 = vpack.c.b16 %v201, %v199
  %v252 = vpack.c.b16 %v202, %v200
  %v253 = vpack.c.b16 %v205, %v203
  %v254 = vpack.c.b16 %v206, %v204
  %v255 = vpack.c.b16 %v209, %v207
  %v256 = vpack.c.b16 %v210, %v208
  %v257 = vpack.c.b16 %v213, %v211
  %v258 = vpack.c.b16 %v214, %v212
  %v259 = vpack.c.b16 %v215, %v215
  %v260 = vpack.c.b16 %v216, %v216
  %vm303 = vcmask 719872
  %v305 = vsel %vm303, %v38, 0
  %vm307 = vcmask 1043456
  %v309 = vsel %vm307, %v259, 0
  %v312 = vsel %vm307, %v260, 0
  %314 = vmatpush.bf16.msra.mxu0 %v231
  %315 = vmatpush.bf16.msra.mxu0 %v229
  %316 = vmatpush.bf16.msra.mxu0 %v227
  %317 = vmatpush.bf16.msra.mxu0 %v225
  %318 = vmatpush.bf16.msra.mxu0 %v223
  %319 = vmatpush.bf16.msra.mxu0 %v221
  %320 = vmatpush.bf16.msra.mxu0 %v219
  %321 = vmatpush.bf16.msra.mxu0 %v217
  %322 = vmatmul.bf16.gmra.mxu0 %v36
  %v323 = vpop.f32.mrf.mxu0
  %v324 = vadd.f32 %v84, %v323
  %v325 = vpop.f32.mrf.mxu0
  %326 = vdwg.mxu0
  %327 = vmatpush.bf16.msra.mxu0 %v247
  %328 = vmatpush.bf16.msra.mxu0 %v245
  %329 = vmatpush.bf16.msra.mxu0 %v243
  %330 = vmatpush.bf16.msra.mxu0 %v241
  %331 = vmatpush.bf16.msra.mxu0 %v239
  %332 = vmatpush.bf16.msra.mxu0 %v237
  %333 = vmatpush.bf16.msra.mxu0 %v235
  %334 = vmatpush.bf16.msra.mxu0 %v233
  %335 = vmatmul.bf16.gmra.mxu0 %v37
  %v336 = vpop.f32.mrf.mxu0
  %v337 = vadd.f32 %v324, %v336
  %v338 = vpop.f32.mrf.mxu0
  %339 = vdwg.mxu0
  %340 = vmatpush.bf16.msra.mxu0 0
  %341 = vmatpush.bf16.msra.mxu0 0
  %342 = vmatpush.bf16.msra.mxu0 %v309
  %343 = vmatpush.bf16.msra.mxu0 %v257
  %344 = vmatpush.bf16.msra.mxu0 %v255
  %345 = vmatpush.bf16.msra.mxu0 %v253
  %346 = vmatpush.bf16.msra.mxu0 %v251
  %347 = vmatpush.bf16.msra.mxu0 %v249
  %348 = vmatmul.bf16.gmra.mxu0 %v305
  %v349 = vpop.f32.mrf.mxu0
  %v350 = vadd.f32 %v337, %v349
  %v351 = vpop.f32.mrf.mxu0
  %352 = vdwg.mxu0
  %353 = vmatpush.bf16.msra.mxu0 %v232
  %354 = vmatpush.bf16.msra.mxu0 %v230
  %355 = vmatpush.bf16.msra.mxu0 %v228
  %356 = vmatpush.bf16.msra.mxu0 %v226
  %357 = vmatpush.bf16.msra.mxu0 %v224
  %358 = vmatpush.bf16.msra.mxu0 %v222
  %359 = vmatpush.bf16.msra.mxu0 %v220
  %360 = vmatpush.bf16.msra.mxu0 %v218
  %361 = vmatmul.bf16.gmra.mxu0 %v36
  %v362 = vpop.f32.mrf.mxu0
  %v363 = vadd.f32 %v85, %v362
  %v364 = vpop.f32.mrf.mxu0
  %365 = vdwg.mxu0
  %366 = vmatpush.bf16.msra.mxu0 %v248
  %367 = vmatpush.bf16.msra.mxu0 %v246
  %368 = vmatpush.bf16.msra.mxu0 %v244
  %369 = vmatpush.bf16.msra.mxu0 %v242
  %370 = vmatpush.bf16.msra.mxu0 %v240
  %371 = vmatpush.bf16.msra.mxu0 %v238
  %372 = vmatpush.bf16.msra.mxu0 %v236
  %373 = vmatpush.bf16.msra.mxu0 %v234
  %374 = vmatmul.bf16.gmra.mxu0 %v37
  %v375 = vpop.f32.mrf.mxu0
  %v376 = vadd.f32 %v363, %v375
  %v377 = vpop.f32.mrf.mxu0
  %378 = vdwg.mxu0
  %379 = vmatpush.bf16.msra.mxu0 0
  %380 = vmatpush.bf16.msra.mxu0 0
  %381 = vmatpush.bf16.msra.mxu0 %v312
  %382 = vmatpush.bf16.msra.mxu0 %v258
  %383 = vmatpush.bf16.msra.mxu0 %v256
  %384 = vmatpush.bf16.msra.mxu0 %v254
  %385 = vmatpush.bf16.msra.mxu0 %v252
  %386 = vmatpush.bf16.msra.mxu0 %v250
  %387 = vmatmul.bf16.gmra.mxu0 %v305
  %v388 = vpop.f32.mrf.mxu0
  %v389 = vadd.f32 %v376, %v388
  %v390 = vpop.f32.mrf.mxu0
  %391 = vdwg.mxu0
  %v392 = vmax.f32 %v350, 0.0
  %v393 = vmax.f32 %v389, 0.0
  %v394 = vpack.c.bf16 %v392, %v392
  %v395 = vpack.c.bf16 %v393, %v393
  %v396 = vld [vmem:[%s2] sm:$0xf]
  %v397 = vld [vmem:[%s2 + $0x4] sm:$0xf]
  %v398 = vld [vmem:[%s2 + $0x8] sm:$0xf]
  %v399 = vld [vmem:[%s2 + $0xc] sm:$0xf]
  %v400 = vld [vmem:[%s2 + $0x10] sm:$0xf]
  %v401 = vld [vmem:[%s2 + $0x14] sm:$0xf]
  %v402 = vld [vmem:[%s2 + $0x18] sm:$0xf]
  %v403 = vld [vmem:[%s2 + $0x1c] sm:$0xf]
  %v404 = vld [vmem:[%s2 + $0x20] sm:$0xf]
  %v405 = vld [vmem:[%s2 + $0x24] sm:$0xf]
  %v406 = vld [vmem:[%s2 + $0x28] sm:$0xf]
  %v407 = vld [vmem:[%s2 + $0x2c] sm:$0xf]
  %v408 = vld [vmem:[%s2 + $0x30] sm:$0xf]
  %v409 = vld [vmem:[%s2 + $0x34] sm:$0xf]
  %v410 = vld [vmem:[%s2 + $0x38] sm:$0xf]
  %v411 = vld [vmem:[%s2 + $0x3c] sm:$0xf]
  %v412 = vld [vmem:[%s2 + $0x40] sm:$0xf]
  %v413 = vld [vmem:[%s2 + $0x44] sm:$0xf]
  %v414 = vld [vmem:[%s2 + $0x48] sm:$0xf]
  %v415 = vld [vmem:[%s2 + $0x4c] sm:$0xf]
  %v416 = vld [vmem:[%s2 + $0x50] sm:$0xf]
  %v417 = vld [vmem:[%s2 + $0x54] sm:$0xf]
  %v418 = vld [vmem:[%s2 + $0x58] sm:$0xf]
  %v419 = vld [vmem:[%s2 + $0x5c] sm:$0xf]
  %v420 = vld [vmem:[%s2 + $0x60] sm:$0xf]
  %v421 = vld [vmem:[%s6] sm:$0x1]
  %v423 = vperm.slane %v421, 0
  %v450 = vunpack.c.l.b16 %v396
  %v451 = vunpack.c.l.b16 %v397
  %v452 = vunpack.c.l.b16 %v398
  %v453 = vunpack.c.l.b16 %v399
  %v454 = vunpack.c.l.b16 %v400
  %v455 = vunpack.c.l.b16 %v401
  %v456 = vunpack.c.l.b16 %v402
  %v457 = vunpack.c.l.b16 %v403
  %v458 = vunpack.c.l.b16 %v404
  %v459 = vunpack.c.l.b16 %v405
  %v460 = vunpack.c.l.b16 %v406
  %v461 = vunpack.c.l.b16 %v407
  %v462 = vunpack.c.l.b16 %v408
  %v463 = vunpack.c.l.b16 %v409
  %v464 = vunpack.c.l.b16 %v410
  %v465 = vunpack.c.l.b16 %v411
  %v466 = vunpack.c.l.b16 %v412
  %v467 = vunpack.c.l.b16 %v413
  %v468 = vunpack.c.l.b16 %v414
  %v469 = vunpack.c.l.b16 %v415
  %v470 = vunpack.c.l.b16 %v416
  %v471 = vunpack.c.l.b16 %v417
  %v472 = vunpack.c.l.b16 %v418
  %v473 = vunpack.c.l.b16 %v419
  %v474 = vunpack.c.l.b16 %v420
  %v475 = vpack.c.b16 %v451, %v450
  %v476 = vpack.c.b16 %v453, %v452
  %v477 = vpack.c.b16 %v455, %v454
  %v478 = vpack.c.b16 %v457, %v456
  %v479 = vpack.c.b16 %v459, %v458
  %v480 = vpack.c.b16 %v461, %v460
  %v481 = vpack.c.b16 %v463, %v462
  %v482 = vpack.c.b16 %v465, %v464
  %v483 = vpack.c.b16 %v467, %v466
  %v484 = vpack.c.b16 %v469, %v468
  %v485 = vpack.c.b16 %v471, %v470
  %v486 = vpack.c.b16 %v473, %v472
  %v487 = vpack.c.b16 %v474, %v474
  %vm500 = vcmask 588800
  %v502 = vsel %vm500, %v395, 0
  %v505 = vsel %vm307, %v487, 0
  %507 = vmatpush.bf16.msra.mxu0 %v482
  %508 = vmatpush.bf16.msra.mxu0 %v481
  %509 = vmatpush.bf16.msra.mxu0 %v480
  %510 = vmatpush.bf16.msra.mxu0 %v479
  %511 = vmatpush.bf16.msra.mxu0 %v478
  %512 = vmatpush.bf16.msra.mxu0 %v477
  %513 = vmatpush.bf16.msra.mxu0 %v476
  %514 = vmatpush.bf16.msra.mxu0 %v475
  %515 = vmatmul.bf16.gmra.mxu0 %v394
  %v516 = vpop.f32.mrf.mxu0
  %v517 = vadd.f32 %v423, %v516
  %v518 = vpop.f32.mrf.mxu0
  %519 = vdwg.mxu0
  %520 = vmatpush.bf16.msra.mxu0 0
  %521 = vmatpush.bf16.msra.mxu0 0
  %522 = vmatpush.bf16.msra.mxu0 0
  %523 = vmatpush.bf16.msra.mxu0 %v505
  %524 = vmatpush.bf16.msra.mxu0 %v486
  %525 = vmatpush.bf16.msra.mxu0 %v485
  %526 = vmatpush.bf16.msra.mxu0 %v484
  %527 = vmatpush.bf16.msra.mxu0 %v483
  %528 = vmatmul.bf16.gmra.mxu0 %v502
  %v529 = vpop.f32.mrf.mxu0
  %v530 = vadd.f32 %v517, %v529
  %v531 = vpop.f32.mrf.mxu0
  %532 = vdwg.mxu0
  %v533 = vmax.f32 %v530, 0.0
  %v534 = vpack.c.bf16 %v533, %v533
  %v535 = vld [vmem:[%s3] sm:$0xf]
  %v536 = vld [vmem:[%s3 + $0x4] sm:$0xf]
  %v537 = vld [vmem:[%s3 + $0x8] sm:$0xf]
  %v538 = vld [vmem:[%s3 + $0xc] sm:$0xf]
  %v539 = vld [vmem:[%s3 + $0x10] sm:$0xf]
  %v540 = vld [vmem:[%s3 + $0x14] sm:$0xf]
  %v541 = vld [vmem:[%s3 + $0x18] sm:$0xf]
  %v542 = vld [vmem:[%s3 + $0x1c] sm:$0xf]
  %v543 = vld [vmem:[%s3 + $0x20] sm:$0xf]
  %v544 = vld [vmem:[%s3 + $0x24] sm:$0xf]
  %v545 = vld [vmem:[%s3 + $0x28] sm:$0xf]
  %v546 = vld [vmem:[%s3 + $0x2c] sm:$0xf]
  %v547 = vld [vmem:[%s3 + $0x30] sm:$0x3]
  %v548 = vld [vmem:[%s7] sm:$0x1]
  %v550 = vperm.slane %v548, 0
  %v565 = vunpack.c.l.b16 %v535
  %v566 = vunpack.c.l.b16 %v536
  %v567 = vunpack.c.l.b16 %v537
  %v568 = vunpack.c.l.b16 %v538
  %v569 = vunpack.c.l.b16 %v539
  %v570 = vunpack.c.l.b16 %v540
  %v571 = vunpack.c.l.b16 %v541
  %v572 = vunpack.c.l.b16 %v542
  %v573 = vunpack.c.l.b16 %v543
  %v574 = vunpack.c.l.b16 %v544
  %v575 = vunpack.c.l.b16 %v545
  %v576 = vunpack.c.l.b16 %v546
  %v577 = vunpack.c.l.b16 %v547
  %v578 = vpack.c.b16 %v566, %v565
  %v579 = vpack.c.b16 %v568, %v567
  %v580 = vpack.c.b16 %v570, %v569
  %v581 = vpack.c.b16 %v572, %v571
  %v582 = vpack.c.b16 %v574, %v573
  %v583 = vpack.c.b16 %v576, %v575
  %v584 = vpack.c.b16 %v577, %v577
  %vm591 = vcmask 818176
  %v593 = vsel %vm591, %v534, 0
  %vm595 = vcmask 1041408
  %v597 = vsel %vm595, %v584, 0
  %599 = vmatpush.bf16.msra.mxu0 0
  %600 = vmatpush.bf16.msra.mxu0 %v597
  %601 = vmatpush.bf16.msra.mxu0 %v583
  %602 = vmatpush.bf16.msra.mxu0 %v582
  %603 = vmatpush.bf16.msra.mxu0 %v581
  %604 = vmatpush.bf16.msra.mxu0 %v580
  %605 = vmatpush.bf16.msra.mxu0 %v579
  %606 = vmatpush.bf16.msra.mxu0 %v578
  %607 = vmatmul.bf16.gmra.mxu0 %v593
  %v608 = vpop.f32.mrf.mxu0
  %v609 = vadd.f32 %v550, %v608
  %v610 = vpop.f32.mrf.mxu0
  %611 = vdwg.mxu0
  %v612 = vmax.f32 %v609, 0.0
  %v613 = vpack.c.bf16 %v612, %v612
  %v614 = vld [vmem:[%s4] sm:$0xf]
  %v615 = vld [vmem:[%s4 + $0x4] sm:$0x1]
  %v616 = vld [vmem:[%s8] sm:$0x1]
  %v618 = vperm.slane %v616, 0
  %v622 = vunpack.c.l.b16 %v614
  %v623 = vunpack.c.l.b16 %v615
  %v624 = vpack.c.b16 %v623, %v622
  %vm625 = vcmask 80896
  %v627 = vsel %vm625, %v613, 0
  %vm629 = vcmask 1044480
  %v631 = vsel %vm629, %v624, 0
  %633 = vmatpush.bf16.msra.mxu0 0
  %634 = vmatpush.bf16.msra.mxu0 0
  %635 = vmatpush.bf16.msra.mxu0 0
  %636 = vmatpush.bf16.msra.mxu0 0
  %637 = vmatpush.bf16.msra.mxu0 0
  %638 = vmatpush.bf16.msra.mxu0 0
  %639 = vmatpush.bf16.msra.mxu0 0
  %640 = vmatpush.bf16.msra.mxu0 %v631
  %641 = vmatmul.bf16.gmra.mxu0 %v627
  %v642 = vpop.f32.mrf.mxu0
  %v643 = vadd.f32 %v618, %v642
  %v644 = vpop.f32.mrf.mxu0
  %645 = vdwg.mxu0
  %vm646 = vcmask 15360
  %647 = vst.msk [vmem:[%s9] sm:$0xff] %vm646, %v643
  // Predicated region
  $region38: #{tpu_custom_call.1} parent=0 // pred_check
    _
  $region39: #{tpu_custom_call.1} parent=0 // pred_check_branch
    %649 = sbr.rel (0) target = $region41
  $region40: #{tpu_custom_call.1} parent=0 // pred_region
    _
  $region41: #{tpu_custom_call.1} parent=0 // pred_fallthru
    _
  // Predicated region
  $region42: #{tpu_custom_call.1} parent=0 // pred_check
    _
  $region43: #{tpu_custom_call.1} parent=0 // pred_check_branch
    %651 = sbr.rel (0) target = $region45
  $region44: #{tpu_custom_call.1} parent=0 // pred_region
    _
  $region45: #{tpu_custom_call.1} parent=0 // pred_fallthru
    _

</llo_original>
